<compile_context>
chip_gen: v7x
topology: tpu7x:2x2x1
jax: 0.10.0
libtpu: 0.0.40
codegen_flags: <defaults>
</compile_context>

<pallas_src>
import functools

import jax
import jax.numpy as jnp
from jax import lax
from jax.experimental import pallas as pl
from jax.experimental.pallas import tpu as pltpu


def _round_up(x, m):
    return ((x + m - 1) // m) * m


def _vmem_limit_bytes():
    """Per-generation VMEM limit: ~48 MiB on v7x (64 MiB physical), ~96 MiB on v5e/v6e."""
    try:
        cap = int(pltpu.get_tpu_info().vmem_capacity_bytes)
    except Exception:  # emulator / older API: assume the smallest (v7x-like) capacity
        cap = 64 * 1024 * 1024
    return min((cap * 3) // 4, 96 * 1024 * 1024)


def _ce_partial_kernel(logits_ref, targets_ref, out_ref, *, tile_n, n_true):
    """Per-tile partial sum of per-sample cross-entropy -> this tile's own output block."""
    pid = pl.program_id(0)

    x_raw = logits_ref[...]                                   # (tile_n, c_pad), input dtype
    t = targets_ref[...]                                      # (tile_n, 1) int32

    # Numerically stable log-sum-exp in f32 (bf16 ingest halves HBM traffic; math in f32).
    x = x_raw.astype(jnp.float32)
    m = jnp.max(x, axis=-1, keepdims=True)                    # (tile_n, 1)
    lse = m + jnp.log(jnp.sum(jnp.exp(x - m), axis=-1, keepdims=True))
    # TODO(synk): if bundle dumps show the class-axis add tree saturating VALU on the
    # bf16 path (v6e/v7x), offload this exp-sum to the idle MXU via a ones-matmul.

    # Target gather via compare+select on the *raw* block (one fewer consumer of the
    # f32 upcast); exactly one non-zero per row, so the narrow sum is exact.
    col = lax.broadcasted_iota(jnp.int32, x_raw.shape, 1)
    tgt = jnp.sum(jnp.where(col == t, x_raw, 0), axis=-1, keepdims=True).astype(jnp.float32)

    # Mask padded rows on lse only; tgt is already 0 there (padded logits/targets are 0).
    row = pid * tile_n + lax.broadcasted_iota(jnp.int32, lse.shape, 0)
    lse = jnp.where(row < n_true, lse, 0.0)

    tile_sum = jnp.sum(lse - tgt)                              # f32 scalar
    out_ref[...] = jnp.broadcast_to(tile_sum, out_ref.shape).astype(jnp.float32)


def focal_loss(logits, targets, *, alpha=1.0, gamma=2, tile_rows=512):
    """FocalLoss.forward: logits (N, C) float, targets (N,) int class ids -> scalar f32."""
    n, c = (int(d) for d in logits.shape)
    in_itemsize = jnp.dtype(logits.dtype).itemsize

    # Lane-align the class axis; pad with a large negative so max / logsumexp are exact
    # (col == t never selects padded columns because t < C).
    c_pad = _round_up(c, 128)
    x = logits
    if c_pad != c:
        neg = float(jnp.finfo(logits.dtype).min) / 2
        x = jnp.pad(x, ((0, 0), (0, c_pad - c)), constant_values=neg)

    # Row tile: largest multiple of 8 (<= tile_rows) whose 2 double-buffered input
    # blocks + ~2 tile-sized f32 temporaries fit the VMEM budget.
    vmem_limit = _vmem_limit_bytes()
    fit_budget = (vmem_limit * 3) // 4
    per_row_bytes = c_pad * (2 * in_itemsize + 2 * 4) + 2 * 4
    tile_n = max(8, (min(tile_rows, fit_budget // per_row_bytes, _round_up(n, 8)) // 8) * 8)
    n_pad = _round_up(n, tile_n)

    t = targets.astype(jnp.int32).reshape(n, 1)
    if n_pad != n:
        x = jnp.pad(x, ((0, n_pad - n), (0, 0)))              # padded rows: all-zero logits
        t = jnp.pad(t, ((0, n_pad - n), (0, 0)))              # padded targets: class 0

    num_tiles = n_pad // tile_n
    kernel = functools.partial(_ce_partial_kernel, tile_n=tile_n, n_true=n)

    cost = pl.CostEstimate(
        flops=5 * n_pad * c_pad,
        transcendentals=n_pad * c_pad + n_pad,
        bytes_accessed=n_pad * c_pad * in_itemsize + n_pad * 4 + num_tiles * 8 * 128 * 4,
    )

    # Per-tile partial sums on a fully "parallel" grid: every output block is written
    # exactly once (no cross-step accumulator), so v7x can shard tiles over both TCs.
    # (1, 8, 128) output blocks keep the stores full-vreg and unmasked.
    partials = pl.pallas_call(
        kernel,
        out_shape=jax.ShapeDtypeStruct((num_tiles, 8, 128), jnp.float32),
        grid_spec=pltpu.PrefetchScalarGridSpec(
            num_scalar_prefetch=0,
            grid=(num_tiles,),
            in_specs=[
                pl.BlockSpec((tile_n, c_pad), lambda i: (i, 0)),
                pl.BlockSpec((tile_n, 1), lambda i: (i, 0)),
            ],
            out_specs=pl.BlockSpec((1, 8, 128), lambda i: (i, 0, 0)),
        ),
        compiler_params=pltpu.CompilerParams(
            dimension_semantics=("parallel",),
            vmem_limit_bytes=vmem_limit,
        ),
        cost_estimate=cost,
    )(x, t)

    # Tiny finalize in the wrapper (scalar work; generic in gamma).
    ce = jnp.sum(partials[:, 0, 0]) / jnp.float32(n)
    pt = jnp.exp(-ce)
    return alpha * (1.0 - pt) ** gamma * ce


def focal_loss_ref(logits, targets, *, alpha=1.0, gamma=2):
    """Pure-JAX reference (same quirky semantics as the PyTorch module)."""
    lse = jax.scipy.special.logsumexp(logits, axis=-1)
    tgt = jnp.take_along_axis(logits, targets[:, None], axis=-1)[:, 0]
    ce = jnp.mean(lse - tgt)
    pt = jnp.exp(-ce)
    return alpha * (1.0 - pt) ** gamma * ce


if __name__ == "__main__":
    key = jax.random.PRNGKey(0)
    k1, k2, k3, k4, k5, k6 = jax.random.split(key, 6)

    # Test 1: f32 logits, single tile, class axis needs lane padding (32 -> 128).
    N1, C1 = 8, 32
    logits1 = jax.random.normal(k1, (N1, C1), dtype=jnp.float32)
    targets1 = jax.random.randint(k2, (N1,), 0, C1, dtype=jnp.int32)
    out1 = jax.block_until_ready(focal_loss(logits1, targets1))
    ref1 = focal_loss_ref(logits1, targets1)
    assert jnp.allclose(out1, ref1, atol=1e-5, rtol=1e-5), (out1, ref1)

    # Test 2: bf16 ingest (half-traffic path) + ragged batch (row-mask path).
    N2, C2 = 20, 40
    logits2 = jax.random.normal(k3, (N2, C2), dtype=jnp.float32).astype(jnp.bfloat16)
    targets2 = jax.random.randint(k4, (N2,), 0, C2, dtype=jnp.int32)
    out2 = jax.block_until_ready(focal_loss(logits2, targets2))
    ref2 = focal_loss_ref(logits2.astype(jnp.float32), targets2)
    assert jnp.allclose(out2, ref2, atol=1e-4, rtol=1e-4), (out2, ref2)

    # Test 3: multi-tile "parallel" partial sums + ragged last tile + C padding.
    N3, C3 = 300, 200
    logits3 = jax.random.normal(k5, (N3, C3), dtype=jnp.float32)
    targets3 = jax.random.randint(k6, (N3,), 0, C3, dtype=jnp.int32)
    out3 = jax.block_until_ready(focal_loss(logits3, targets3, tile_rows=64))
    ref3 = focal_loss_ref(logits3, targets3)
    assert jnp.allclose(out3, ref3, atol=1e-5, rtol=1e-5), (out3, ref3)

    print("KERNEL_OK")
</pallas_src>

<mosaic_0001>
module attributes {stable_mosaic.version = 11 : i64} {
  func.func @_ce_partial_kernel(%arg0: i32, %arg1: memref<8x128xf32, #tpu.memory_space<vmem>>, %arg2: memref<8x1xi32, #tpu.memory_space<vmem>>, %arg3: memref<1x8x128xf32, #tpu.memory_space<vmem>>) attributes {dimension_semantics = [#tpu.dimension_semantics<parallel>], iteration_bounds = array<i64: 1>, scalar_prefetch = 0 : i64, scratch_operands = 0 : i64, tpu.core_type = #tpu.core_type<tc>, window_params = [{transform_indices = @transform_0, window_bounds = array<i64: 8, 128>}, {transform_indices = @transform_1, window_bounds = array<i64: 8, 1>}, {transform_indices = @transform_2, window_bounds = array<i64: 1, 8, 128>}]} {
    %c0 = arith.constant 0 : index
    %c0_0 = arith.constant 0 : index
    %0 = vector.load %arg1[%c0, %c0_0] : memref<8x128xf32, #tpu.memory_space<vmem>>, vector<8x128xf32>
    %c0_1 = arith.constant 0 : index
    %c0_2 = arith.constant 0 : index
    %1 = vector.load %arg2[%c0_1, %c0_2] : memref<8x1xi32, #tpu.memory_space<vmem>>, vector<8x1xi32>
    %cst = arith.constant dense<0xFF800000> : vector<8xf32>
    %2 = vector.multi_reduction <maximumf>, %0, %cst [1] : vector<8x128xf32> to vector<8xf32>
    %3 = vector.shape_cast %2 : vector<8xf32> to vector<8x1xf32>
    %4 = vector.broadcast %3 : vector<8x1xf32> to vector<8x128xf32>
    %5 = arith.subf %0, %4 : vector<8x128xf32>
    %6 = math.exp %5 : vector<8x128xf32>
    %cst_3 = arith.constant dense<0.000000e+00> : vector<8xf32>
    %7 = vector.multi_reduction <add>, %6, %cst_3 [1] : vector<8x128xf32> to vector<8xf32>
    %8 = vector.shape_cast %7 : vector<8xf32> to vector<8x1xf32>
    %9 = math.log %8 : vector<8x1xf32>
    %10 = arith.addf %3, %9 : vector<8x1xf32>
    %11 = tpu.iota {dimensions = array<i32: 1>} : vector<8x128xi32>
    %12 = vector.broadcast %1 : vector<8x1xi32> to vector<8x128xi32>
    %13 = arith.cmpi eq, %11, %12 : vector<8x128xi32>
    %c0_i32 = arith.constant 0 : i32
    %14 = arith.sitofp %c0_i32 : i32 to f32
    %15 = vector.broadcast %14 : f32 to vector<8x128xf32>
    %16 = arith.select %13, %0, %15 : vector<8x128xi1>, vector<8x128xf32>
    %cst_4 = arith.constant dense<0.000000e+00> : vector<8xf32>
    %17 = vector.multi_reduction <add>, %16, %cst_4 [1] : vector<8x128xf32> to vector<8xf32>
    %18 = vector.shape_cast %17 : vector<8xf32> to vector<8x1xf32>
    %c8_i32 = arith.constant 8 : i32
    %19 = arith.muli %arg0, %c8_i32 : i32
    %20 = tpu.iota {dimensions = array<i32: 0>} : vector<8x1xi32>
    %21 = vector.broadcast %19 : i32 to vector<8x1xi32>
    %22 = arith.addi %21, %20 : vector<8x1xi32>
    %c8_i32_5 = arith.constant 8 : i32
    %23 = vector.broadcast %c8_i32_5 : i32 to vector<8x1xi32>
    %24 = arith.cmpi slt, %22, %23 : vector<8x1xi32>
    %cst_6 = arith.constant 0.000000e+00 : f32
    %25 = vector.broadcast %cst_6 : f32 to vector<8x1xf32>
    %26 = arith.select %24, %10, %25 : vector<8x1xi1>, vector<8x1xf32>
    %27 = arith.subf %26, %18 : vector<8x1xf32>
    %28 = vector.shape_cast %27 : vector<8x1xf32> to vector<1x8x1xf32>
    %cst_7 = arith.constant dense<0.000000e+00> : vector<1xf32>
    %29 = vector.multi_reduction <add>, %28, %cst_7 [1, 2] : vector<1x8x1xf32> to vector<1xf32>
    %30 = vector.shape_cast %29 : vector<1xf32> to vector<1x1x1xf32>
    %31 = vector.extract %30[0, 0, 0] : f32 from vector<1x1x1xf32>
    %32 = vector.broadcast %31 : f32 to vector<1x8x128xf32>
    %c0_8 = arith.constant 0 : index
    %c0_9 = arith.constant 0 : index
    %c0_10 = arith.constant 0 : index
    %33 = vector.load %arg3[%c0_8, %c0_9, %c0_10] : memref<1x8x128xf32, #tpu.memory_space<vmem>>, vector<1x8x128xf32>
    tpu.vector_store %arg3[%c0_8, %c0_9, %c0_10], %32 {strides = array<i32>} : memref<1x8x128xf32, #tpu.memory_space<vmem>>, vector<1x8x128xf32>,
    return
  }
  func.func @transform_0(%arg0: i32) -> (i32, i32) {
    %c0_i32 = arith.constant 0 : i32
    %c0_i32_0 = arith.constant 0 : i32
    return %arg0, %c0_i32 : i32, i32
  }
  func.func @transform_1(%arg0: i32) -> (i32, i32) {
    %c0_i32 = arith.constant 0 : i32
    %c0_i32_0 = arith.constant 0 : i32
    return %arg0, %c0_i32 : i32, i32
  }
  func.func @transform_2(%arg0: i32) -> (i32, i32, i32) {
    %c0_i32 = arith.constant 0 : i32
    %c0_i32_0 = arith.constant 0 : i32
    %c0_i32_1 = arith.constant 0 : i32
    return %arg0, %c0_i32, %c0_i32_0 : i32, i32, i32
  }
}

</mosaic_0001>

<llo_original>
// kernel: tpu_custom_call.1
$region0: #{tpu_custom_call.1}
  #allocation0 [shape = 'u32[]', space=smem, size = 0x4, offset = 0x4, fixed_abs, tag = 'smem constant byte address 0x4 - core index']
  #allocation1 [shape = 'u32[144,128]{1,0:T(1,128)}', space=vmem, size = 0x12000, scoped, tag = 'internal scratch']
  %s0 = inlined_call_operand.vmem [shape: f32[8,128], index: 0, kind: input, shape index: {}]
  %s1 = inlined_call_operand.vmem [shape: s32[8,1], index: 1, kind: input, shape index: {}]
  %s2 = inlined_call_operand.hbm [shape: f32[1,8,128], index: 2, kind: output, shape index: {}]
  %s3 = sld [smem:[#allocation0]]
  $region18: #{tpu_custom_call.1} parent=0
    _
  %s5 = ssub.s32 1, %s3
  %s6 = scalar_select 0, %s5, %s3
  $region1: #{tpu_custom_call.1} parent=0
    #allocation2 [shape = 'u8[4096]{0}', space=vmem, size = 0x1000, scoped, tag = 'output window, operand 0, single buffered']
    #allocation3 [shape = 's32[1]{0}', space=sflag, size = 0x4, scoped, tag = 'scoped memory for tpu_custom_call.1']
    %7 = vsyncpa [#allocation3], 0
    // Predicated region
    $region2: #{tpu_custom_call.1} parent=1 // pred_check
      _
    $region3: #{tpu_custom_call.1} parent=1 // pred_check_branch
      %9 = sbr.rel (0) target = $region5
    $region4: #{tpu_custom_call.1} parent=1 // pred_region
      _
    $region5: #{tpu_custom_call.1} parent=1 // pred_fallthru
      _
    // Predicated region
    $region6: #{tpu_custom_call.1} parent=1 // pred_check
      _
    $region7: #{tpu_custom_call.1} parent=1 // pred_check_branch
      %11 = sbr.rel (0) target = $region9
    $region8: #{tpu_custom_call.1} parent=1 // pred_region
      _
    $region9: #{tpu_custom_call.1} parent=1 // pred_fallthru
      _
    %v12 = vld [vmem:[%s0] sm:$0xff]
    %v13 = vld [vmem:[%s1] sm:$0xff]
    %14 = vmax.xlane.f32.xlu0 %v12
    %v15 = vpop.xlane.xlu0 %14
    %v16 = vsub.f32 %v12, %v15
    %v17 = vmul.f32 %v16, 1.442695
    %v18 = vpow.pop %v17
    %19 = vadd.xlane.f32.xlu0 %v18
    %v20 = vpop.xlane.xlu0 %19
    %v21 = vlog2.pop %v20
    %v22 = vmul.f32 %v21, 0.6931472
    %v23 = vadd.f32 %v15, %v22
    %v24 = vlaneseq
    %v25 = vand.u32 %v24, 127
    %26 = vset.pattern.permute.xlu0 0
    %27 = vperm.xlu0 %26, %v13
    %v28 = vpop.permute.xlu0 %27
    %vm29 = vcmp.eq.s32.totalorder %v25, %v28
    %v30 = vsel %vm29, %v12, 0.0
    %31 = vadd.xlane.f32.xlu0 %v30
    %v32 = vpop.xlane.xlu0 %31
    %s33 = smul.u32 0, 8
    %v34 = vlaneseq
    %v35 = vshrl.u32 %v34, 7
    %v36 = vstv %s33
    %v37 = vadd.s32 %v36, %v35
    %vm38 = vcmp.lt.s32.totalorder %v37, 8
    %v39 = vsel %vm38, %v23, 0.0
    %v40 = vsub.f32 %v39, %v32
    %vm41 = vcmask 7168
    %v42 = vsel %vm41, %v40, 0.0
    %43 = vadd.xlane.f32.xlu0 %v42
    %v44 = vpop.xlane.xlu0 %43
    %v45 = vrot.slane %v44, 4
    %v46 = vadd.f32 %v44, %v45
    %v47 = vrot.slane %v46, 2
    %v48 = vadd.f32 %v46, %v47
    %v49 = vrot.slane %v48, 1
    %v50 = vadd.f32 %v48, %v49
    %s51 = vtos %v50
    %v52 = vstv %s51
    %53 = vst [vmem:[#allocation2] sm:$0xff] %v52
    // Predicated region
    $region10: #{tpu_custom_call.1} parent=1 // pred_check
      _
    $region11: #{tpu_custom_call.1} parent=1 // pred_check_branch
      %55 = sbr.rel (0) target = $region13
    $region12: #{tpu_custom_call.1} parent=1 // pred_region
      %s57 = ssub.s32 128, 128
      %58 = vsyncadd [#allocation3], %s57
      %s60 = sshll.u32 [#allocation2], 4
      %s61 = int_to_ptr.vmem [resolvable:$true] %s60
      %63 = dma.vmem_to_hbm [thread:$0]  %s61, 128, %s2, [#allocation3]
    $region13: #{tpu_custom_call.1} parent=1 // pred_fallthru
      _
    // Predicated region
    $region14: #{tpu_custom_call.1} parent=1 // pred_check
      _
    $region15: #{tpu_custom_call.1} parent=1 // pred_check_branch
      %65 = sbr.rel (0) target = $region17
    $region16: #{tpu_custom_call.1} parent=1 // pred_region
      %66 = dma.done [#allocation3], 128
    $region17: #{tpu_custom_call.1} parent=1 // pred_fallthru
      _
    %67 = vsyncpa [#allocation3], 1

</llo_original>
